<compile_context>
chip_gen: v6e
topology: v6e:2x2x1
jax: 0.10.0
libtpu: 0.0.40
codegen_flags: <defaults>
</compile_context>

<pallas_src>
import functools

import jax
import jax.numpy as jnp
from jax.experimental import pallas as pl
from jax.experimental.pallas import tpu as pltpu

_LANE_CANDIDATES = (512, 256, 128)      # lane-dense last dims (all give unmasked vst)
_MAX_BLOCK_BYTES = 4 * 1024 * 1024      # ~4 MiB/input/step: f32-stream roofline plateau
_CHUNK_BYTES = 512 * 1024               # in-kernel accumulation chunk size
_VMEM_LIMIT_BYTES = 32 * 1024 * 1024    # explicit scoped VMEM (safe on v5e/v6e/v7x)


def _num_tensorcores():
    """Best-effort count of TensorCores a single Pallas kernel can use."""
    try:
        kind = jax.devices()[0].device_kind.lower()
    except Exception:
        return 1
    # v7x has 2 TCs per chip; v4/v5p expose a 2-TC megacore. v5e/v6e are 1-TC.
    if any(tag in kind for tag in ("v7", "tpu7", "v4", "v5p")):
        return 2
    return 1


def _choose_layout(n):
    """Pick (lanes, pad) so the flat input reshapes to (rows, lanes) with rows >= 8.

    Prefers a lane width that divides n exactly (no extra HBM copy from padding);
    only truly ragged sizes (n % 128 != 0) or tiny inputs pad up to 8*128.
    """
    for lanes in _LANE_CANDIDATES:           # rows a multiple of 8: no pad, no mask
        if n % (8 * lanes) == 0:
            return lanes, 0
    for lanes in _LANE_CANDIDATES:           # no pad; ragged tail rows masked in-kernel
        if n % lanes == 0 and n // lanes >= 8:
            return lanes, 0
    lanes = 128                               # fallback: minimal pad (ragged / tiny n)
    chunk = 8 * lanes
    padded = (-(-n // chunk)) * chunk
    return lanes, padded - n


def _pick_chunk_rows(block_rows, lanes):
    """Largest multiple of 8 <= ~_CHUNK_BYTES rows that divides block_rows."""
    target = max(8, (_CHUNK_BYTES // (lanes * 4) // 8) * 8)
    c = min(target, block_rows)
    c = max(8, (c // 8) * 8)
    while block_rows % c != 0:                # terminates: block_rows is a multiple of 8
        c -= 8
    return c


def _mse_partial_sums_kernel(pred_ref, label_ref, out_ref, *,
                             block_rows, chunk_rows, lanes,
                             steps_per_split, rows, needs_mask):
    """Fold sum((pred-label)^2) for this split into an (8, lanes) vector accumulator."""
    t = pl.program_id(1)

    @pl.when(t == 0)
    def _():
        out_ref[...] = jnp.zeros_like(out_ref)

    n_chunks = block_rows // chunk_rows

    if needs_mask:
        # Unclamped global block index; rows at/after `valid` within this block are
        # garbage (partial tail block, or clamped duplicate block from the parallel
        # split overshoot) and must not contribute.
        g = pl.program_id(0) * steps_per_split + t
        valid = rows - g * block_rows                             # scalar
        sub_iota = jax.lax.broadcasted_iota(jnp.int32, (chunk_rows, lanes), 0)  # hoisted

    acc = jnp.zeros((8, lanes), jnp.float32)
    # Fully-unrolled chunk loop with static slice starts: caps live VMEM temporaries
    # (d/sq) to chunk size instead of block size, keeping the large tiles viable.
    for c in range(n_chunks):
        cs = c * chunk_rows
        d = (pred_ref[cs:cs + chunk_rows, :].astype(jnp.float32)
             - label_ref[cs:cs + chunk_rows, :].astype(jnp.float32))
        if needs_mask:
            # Cheap mask: hoisted iota vs. one scalar (no per-element global-index add).
            d = jnp.where(sub_iota < (valid - cs), d, 0.0)
        sq = d * d
        # Fold sublane groups with pure VPU adds: (chunk_rows, lanes) -> (8, lanes).
        acc = acc + jnp.sum(sq.reshape(chunk_rows // 8, 8, lanes), axis=0)

    out_ref[...] += acc[None, :, :]


def mse_loss_pallas(pred, label):
    """MSE with mean reduction. pred/label: same shape, any rank (e.g. NCHW)."""
    assert pred.shape == label.shape, (pred.shape, label.shape)
    n = pred.size
    flat_p = pred.reshape(-1)
    flat_l = label.reshape(-1)

    lanes, pad = _choose_layout(n)
    if pad:
        # Only for n % 128 != 0 (or tiny inputs). Zero pads contribute 0 to the sum;
        # we divide by the true n below.
        flat_p = jnp.pad(flat_p, (0, pad))
        flat_l = jnp.pad(flat_l, (0, pad))

    rows = (n + pad) // lanes                      # >= 8 by construction
    p2 = flat_p.reshape(rows, lanes)
    l2 = flat_l.reshape(rows, lanes)

    max_block_rows = max(8, (_MAX_BLOCK_BYTES // (lanes * 4) // 8) * 8)
    block_rows = min(max_block_rows, (rows // 8) * 8)          # multiple of 8
    steps_total = -(-rows // block_rows)                        # cdiv
    nsplit = min(_num_tensorcores(), steps_total)               # 2 only on multi-TC chips
    steps_per_split = -(-steps_total // nsplit)                 # cdiv
    overshoot = nsplit * steps_per_split != steps_total
    needs_mask = (rows % block_rows != 0) or overshoot
    chunk_rows = _pick_chunk_rows(block_rows, lanes)

    def in_index_map(s, t):
        g = s * steps_per_split + t
        if overshoot:
            g = jnp.minimum(g, steps_total - 1)    # clamp duplicate blocks of the split
        return (g, 0)

    kernel = functools.partial(
        _mse_partial_sums_kernel,
        block_rows=block_rows,
        chunk_rows=chunk_rows,
        lanes=lanes,
        steps_per_split=steps_per_split,
        rows=rows,
        needs_mask=needs_mask,
    )

    bytes_in = n * (pred.dtype.itemsize + label.dtype.itemsize)
    cost = pl.CostEstimate(
        flops=3 * n,
        transcendentals=0,
        bytes_accessed=bytes_in + nsplit * 8 * lanes * 4,
    )

    partials = pl.pallas_call(
        kernel,
        out_shape=jax.ShapeDtypeStruct((nsplit, 8, lanes), jnp.float32),
        grid_spec=pltpu.PrefetchScalarGridSpec(
            num_scalar_prefetch=0,
            grid=(nsplit, steps_per_split),
            in_specs=[
                pl.BlockSpec((block_rows, lanes), in_index_map),
                pl.BlockSpec((block_rows, lanes), in_index_map),
            ],
            out_specs=pl.BlockSpec((1, 8, lanes), lambda s, t: (s, 0, 0)),
        ),
        compiler_params=pltpu.CompilerParams(
            dimension_semantics=("parallel", "arbitrary"),
            vmem_limit_bytes=_VMEM_LIMIT_BYTES),
        cost_estimate=cost,
    )(p2, l2)

    # Single final cross-lane reduce + division by the *true* element count.
    return (jnp.sum(partials) / jnp.float32(n)).astype(jnp.float32)


def mse_module_forward(results, label):
    """Mirror of MSE.forward(results, label): loss = F.mse_loss(results['mean'], label)."""
    return mse_loss_pallas(results["mean"], label)


if __name__ == "__main__":
    key = jax.random.PRNGKey(0)
    k1, k2, k3, k4, k5, k6 = jax.random.split(key, 6)

    # Primary small NCHW case matching the module's expected usage.
    x_mean = jax.random.normal(k1, (2, 4, 16, 16), dtype=jnp.float32)
    label = jax.random.normal(k2, (2, 4, 16, 16), dtype=jnp.float32)
    loss = jax.block_until_ready(mse_module_forward({"mean": x_mean}, label))
    ref = jnp.mean((x_mean - label) ** 2)
    assert jnp.allclose(loss, ref, rtol=1e-5, atol=1e-6), (loss, ref)

    # Truly ragged (n % 128 != 0) shape -> exercises the minimal-pad fallback.
    a = jax.random.normal(k3, (3, 5, 7, 11), dtype=jnp.float32)
    b = jax.random.normal(k4, (3, 5, 7, 11), dtype=jnp.float32)
    l2 = jax.block_until_ready(mse_loss_pallas(a, b))
    assert jnp.allclose(l2, jnp.mean((a - b) ** 2), rtol=1e-5, atol=1e-6), l2

    # Moderate case: n divisible by 128 but not by 1024 -> no padding copy, multi-step
    # grid, in-kernel tail-row mask (and the clamped duplicate block on 2-TC chips).
    c = jax.random.normal(k5, (8, 8, 130, 127), dtype=jnp.float32)
    e = jax.random.normal(k6, (8, 8, 130, 127), dtype=jnp.float32)
    l3 = jax.block_until_ready(mse_loss_pallas(c, e))
    assert jnp.allclose(l3, jnp.mean((c - e) ** 2), rtol=1e-5, atol=1e-6), l3

    print("KERNEL_OK")
</pallas_src>

<mosaic_0001>
module attributes {stable_mosaic.version = 11 : i64} {
  func.func @_mse_partial_sums_kernel(%arg0: i32, %arg1: i32, %arg2: memref<8x256xf32, #tpu.memory_space<vmem>>, %arg3: memref<8x256xf32, #tpu.memory_space<vmem>>, %arg4: memref<1x8x256xf32, #tpu.memory_space<vmem>>) attributes {dimension_semantics = [#tpu.dimension_semantics<parallel>, #tpu.dimension_semantics<arbitrary>], iteration_bounds = array<i64: 1, 1>, scalar_prefetch = 0 : i64, scratch_operands = 0 : i64, tpu.core_type = #tpu.core_type<tc>, window_params = [{transform_indices = @transform_0, window_bounds = array<i64: 8, 256>}, {transform_indices = @transform_1, window_bounds = array<i64: 8, 256>}, {transform_indices = @transform_2, window_bounds = array<i64: 1, 8, 256>}]} {
    %c0_i32 = arith.constant 0 : i32
    %0 = arith.cmpi eq, %arg1, %c0_i32 : i32
    %1 = arith.extui %0 : i1 to i32
    %c0_i32_0 = arith.constant 0 : i32
    %2 = arith.cmpi ne, %1, %c0_i32_0 : i32
    scf.if %2 {
      %cst_11 = arith.constant 0.000000e+00 : f32
      %15 = vector.broadcast %cst_11 : f32 to vector<1x8x256xf32>
      %c0_12 = arith.constant 0 : index
      %c0_13 = arith.constant 0 : index
      %c0_14 = arith.constant 0 : index
      %16 = vector.load %arg4[%c0_12, %c0_13, %c0_14] : memref<1x8x256xf32, #tpu.memory_space<vmem>>, vector<1x8x256xf32>
      tpu.vector_store %arg4[%c0_12, %c0_13, %c0_14], %15 {strides = array<i32>} : memref<1x8x256xf32, #tpu.memory_space<vmem>>, vector<1x8x256xf32>,
    } else {
    }
    %cst = arith.constant 0.000000e+00 : f32
    %3 = vector.broadcast %cst : f32 to vector<8x256xf32>
    %c0 = arith.constant 0 : index
    %c0_1 = arith.constant 0 : index
    %4 = vector.load %arg2[%c0, %c0_1] : memref<8x256xf32, #tpu.memory_space<vmem>>, vector<8x256xf32>
    %c0_2 = arith.constant 0 : index
    %c0_3 = arith.constant 0 : index
    %5 = vector.load %arg3[%c0_2, %c0_3] : memref<8x256xf32, #tpu.memory_space<vmem>>, vector<8x256xf32>
    %6 = arith.subf %4, %5 : vector<8x256xf32>
    %7 = arith.mulf %6, %6 : vector<8x256xf32>
    %8 = vector.shape_cast %7 : vector<8x256xf32> to vector<1x8x256xf32>
    %cst_4 = arith.constant dense<0.000000e+00> : vector<8x256xf32>
    %9 = vector.multi_reduction <add>, %8, %cst_4 [0] : vector<1x8x256xf32> to vector<8x256xf32>
    %10 = arith.addf %3, %9 : vector<8x256xf32>
    %c0_5 = arith.constant 0 : index
    %c0_6 = arith.constant 0 : index
    %c0_7 = arith.constant 0 : index
    %11 = vector.load %arg4[%c0_5, %c0_6, %c0_7] : memref<1x8x256xf32, #tpu.memory_space<vmem>>, vector<1x8x256xf32>
    %12 = vector.shape_cast %10 : vector<8x256xf32> to vector<1x8x256xf32>
    %13 = arith.addf %11, %12 : vector<1x8x256xf32>
    %c0_8 = arith.constant 0 : index
    %c0_9 = arith.constant 0 : index
    %c0_10 = arith.constant 0 : index
    %14 = vector.load %arg4[%c0_8, %c0_9, %c0_10] : memref<1x8x256xf32, #tpu.memory_space<vmem>>, vector<1x8x256xf32>
    tpu.vector_store %arg4[%c0_8, %c0_9, %c0_10], %13 {strides = array<i32>} : memref<1x8x256xf32, #tpu.memory_space<vmem>>, vector<1x8x256xf32>,
    return
  }
  func.func @transform_0(%arg0: i32, %arg1: i32) -> (i32, i32) {
    %c1_i32 = arith.constant 1 : i32
    %0 = arith.muli %arg0, %c1_i32 : i32
    %1 = arith.addi %0, %arg1 : i32
    %c0_i32 = arith.constant 0 : i32
    %c0_i32_0 = arith.constant 0 : i32
    return %1, %c0_i32 : i32, i32
  }
  func.func @transform_1(%arg0: i32, %arg1: i32) -> (i32, i32) {
    %c1_i32 = arith.constant 1 : i32
    %0 = arith.muli %arg0, %c1_i32 : i32
    %1 = arith.addi %0, %arg1 : i32
    %c0_i32 = arith.constant 0 : i32
    %c0_i32_0 = arith.constant 0 : i32
    return %1, %c0_i32 : i32, i32
  }
  func.func @transform_2(%arg0: i32, %arg1: i32) -> (i32, i32, i32) {
    %c0_i32 = arith.constant 0 : i32
    %c0_i32_0 = arith.constant 0 : i32
    %c0_i32_1 = arith.constant 0 : i32
    return %arg0, %c0_i32, %c0_i32_0 : i32, i32, i32
  }
}

</mosaic_0001>

<llo_original>
// kernel: tpu_custom_call.1
$region0: #{tpu_custom_call.1}
  #allocation0 [shape = 'u32[]', space=smem, size = 0x4, offset = 0x4, fixed_abs, tag = 'smem constant byte address 0x4 - core index']
  #allocation1 [shape = 'u32[144,128]{1,0:T(1,128)}', space=vmem, size = 0x12000, scoped, tag = 'internal scratch']
  %s0 = inlined_call_operand.hbm [shape: f32[8,256], index: 0, kind: input, shape index: {}]
  %s1 = inlined_call_operand.hbm [shape: f32[8,256], index: 1, kind: input, shape index: {}]
  %s2 = inlined_call_operand.hbm [shape: f32[1,8,256], index: 2, kind: output, shape index: {}]
  %s3 = sld [smem:[#allocation0]]
  $region30: #{tpu_custom_call.1} parent=0
    _
  %s5 = ssub.s32 1, %s3
  %s6 = scalar_select 0, %s5, %s3
  $region1: #{tpu_custom_call.1} parent=0
    #allocation2 [shape = 'u8[8192]{0}', space=vmem, size = 0x2000, scoped, tag = 'input window, operand 0, single buffered']
    #allocation3 [shape = 's32[1]{0}', space=sflag, size = 0x4, scoped, tag = 'scoped memory for tpu_custom_call.1']
    #allocation4 [shape = 's32[1]{0}', space=sflag, size = 0x4, scoped, tag = 'scoped memory for tpu_custom_call.1']
    #allocation5 [shape = 'u8[8192]{0}', space=vmem, size = 0x2000, scoped, tag = 'input window, operand 1, single buffered']
    #allocation6 [shape = 's32[1]{0}', space=sflag, size = 0x4, scoped, tag = 'scoped memory for tpu_custom_call.1']
    #allocation7 [shape = 'u8[8192]{0}', space=vmem, size = 0x2000, scoped, tag = 'output window, operand 0, single buffered']
    %7 = vsyncpa [#allocation3], 0
    %8 = vsyncpa [#allocation6], 0
    %9 = vsyncpa [#allocation4], 0
    // Predicated region
    $region2: #{tpu_custom_call.1} parent=1 // pred_check
      _
    $region3: #{tpu_custom_call.1} parent=1 // pred_check_branch
      %11 = sbr.rel (0) target = $region5
    $region4: #{tpu_custom_call.1} parent=1 // pred_region
      %s12 = sadd.s32 0, 0
      %s14 = ssub.s32 256, 256
      %15 = vsyncadd [#allocation3], %s14
      %s16 = smul.addr %s12, 2
      %s17 = smul.addr %s16, 128
      %s18 = scalar_lea.hbm %s0, %s17
      %s20 = sshll.u32 [#allocation2], 4
      %s21 = int_to_ptr.vmem [resolvable:$true] %s20
      %23 = dma.hbm_to_vmem [thread:$0]  %s18, 256, %s21, [#allocation3]
    $region5: #{tpu_custom_call.1} parent=1 // pred_fallthru
      _
    // Predicated region
    $region6: #{tpu_custom_call.1} parent=1 // pred_check
      _
    $region7: #{tpu_custom_call.1} parent=1 // pred_check_branch
      %25 = sbr.rel (0) target = $region9
    $region8: #{tpu_custom_call.1} parent=1 // pred_region
      %s26 = sadd.s32 0, 0
      %s28 = ssub.s32 256, 256
      %29 = vsyncadd [#allocation6], %s28
      %s30 = smul.addr %s26, 2
      %s31 = smul.addr %s30, 128
      %s32 = scalar_lea.hbm %s1, %s31
      %s34 = sshll.u32 [#allocation5], 4
      %s35 = int_to_ptr.vmem [resolvable:$true] %s34
      %37 = dma.hbm_to_vmem [thread:$0]  %s32, 256, %s35, [#allocation6]
    $region9: #{tpu_custom_call.1} parent=1 // pred_fallthru
      _
    // Predicated region
    $region10: #{tpu_custom_call.1} parent=1 // pred_check
      _
    $region11: #{tpu_custom_call.1} parent=1 // pred_check_branch
      %39 = sbr.rel (0) target = $region13
    $region12: #{tpu_custom_call.1} parent=1 // pred_region
      %40 = dma.done [#allocation3], 256
    $region13: #{tpu_custom_call.1} parent=1 // pred_fallthru
      _
    // Predicated region
    $region14: #{tpu_custom_call.1} parent=1 // pred_check
      _
    $region15: #{tpu_custom_call.1} parent=1 // pred_check_branch
      %42 = sbr.rel (0) target = $region17
    $region16: #{tpu_custom_call.1} parent=1 // pred_region
      %43 = dma.done [#allocation6], 256
    $region17: #{tpu_custom_call.1} parent=1 // pred_fallthru
      _
    %s44 = sadd.s32 0, 0
    %s45 = sadd.s32 0, 0
    %p46 = scmp.eq.s32.totalorder 0, 0
    // Predicated region
    $region18: #{tpu_custom_call.1} parent=1 // pred_check
      %p47 = pneg %p46
    $region19: #{tpu_custom_call.1} parent=1 // pred_check_branch
      %49 = sbr.rel (%p47) target = $region21
    $region20: #{tpu_custom_call.1} parent=1 // pred_region
      %50 = vst [vmem:[#allocation7] sm:$0xff] 0.0
      %51 = vst [vmem:[#allocation7 + $0x8] sm:$0xff] 0.0
    $region21: #{tpu_custom_call.1} parent=1 // pred_fallthru
      _
    %v52 = vld [vmem:[#allocation2] sm:$0xff]
    %v53 = vld [vmem:[#allocation2 + $0x8] sm:$0xff]
    %v54 = vld [vmem:[#allocation5] sm:$0xff]
    %v55 = vld [vmem:[#allocation5 + $0x8] sm:$0xff]
    %v56 = vsub.f32 %v52, %v54
    %v57 = vsub.f32 %v53, %v55
    %v58 = vmul.f32 %v56, %v56
    %v59 = vmul.f32 %v57, %v57
    %v60 = vadd.f32 %v58, 0.0
    %v61 = vadd.f32 %v59, 0.0
    %v62 = vadd.f32 %v60, 0.0
    %v63 = vadd.f32 %v61, 0.0
    %v64 = vld [vmem:[#allocation7] sm:$0xff]
    %v65 = vld [vmem:[#allocation7 + $0x8] sm:$0xff]
    %v66 = vadd.f32 %v64, %v62
    %v67 = vadd.f32 %v65, %v63
    %68 = vst [vmem:[#allocation7] sm:$0xff] %v66
    %69 = vst [vmem:[#allocation7 + $0x8] sm:$0xff] %v67
    // Predicated region
    $region22: #{tpu_custom_call.1} parent=1 // pred_check
      _
    $region23: #{tpu_custom_call.1} parent=1 // pred_check_branch
      %71 = sbr.rel (0) target = $region25
    $region24: #{tpu_custom_call.1} parent=1 // pred_region
      %s73 = ssub.s32 256, 256
      %74 = vsyncadd [#allocation4], %s73
      %s76 = sshll.u32 [#allocation7], 4
      %s77 = int_to_ptr.vmem [resolvable:$true] %s76
      %79 = dma.vmem_to_hbm [thread:$0]  %s77, 256, %s2, [#allocation4]
    $region25: #{tpu_custom_call.1} parent=1 // pred_fallthru
      _
    // Predicated region
    $region26: #{tpu_custom_call.1} parent=1 // pred_check
      _
    $region27: #{tpu_custom_call.1} parent=1 // pred_check_branch
      %81 = sbr.rel (0) target = $region29
    $region28: #{tpu_custom_call.1} parent=1 // pred_region
      %82 = dma.done [#allocation4], 256
    $region29: #{tpu_custom_call.1} parent=1 // pred_fallthru
      _
    %83 = vsyncpa [#allocation3], 1
    %84 = vsyncpa [#allocation6], 1
    %85 = vsyncpa [#allocation4], 1

</llo_original>
